<compile_context>
chip_gen: v6e
topology: v6e:2x2x1
jax: 0.10.0
libtpu: 0.0.40
codegen_flags: <defaults>
</compile_context>

<pallas_src>
import numpy as np
import jax
import jax.numpy as jnp
from jax.experimental import pallas as pl
from jax.experimental.pallas import tpu as pltpu


# ----------------------------- irreps config -------------------------------
# irreps_node_input  = "16x0e + 8x1e"  -> dim 16 + 8*3 = 40
# irreps_node_attr   = "1x0e"          -> dim 1
# irreps_node_output = "8x0e + 4x1e"   -> dim 8 + 4*3 = 20
IRREPS_IN = ((16, 0), (8, 1))     # (multiplicity, l)
IRREPS_OUT = ((8, 0), (4, 1))


def irreps_dim(irreps):
    return sum(mul * (2 * l + 1) for mul, l in irreps)


# ------------------------------ Pallas kernel -------------------------------
def fctp_kernel(x_ref, a_ref, w_ref, b_ref, o_ref):
    # Natural-layout MXU matmul, f32 accumulation:
    #   y[tn, Dout] = x[tn, Din] @ W[Din, Dout]
    y = jnp.dot(x_ref[...], w_ref[...], preferred_element_type=jnp.float32)
    # f32 epilogue (v5e-safe): per-node 1x0e attribute scale (broadcast over
    # output channels), bias on output channels (broadcast over nodes).
    y = y * a_ref[...].astype(jnp.float32) + b_ref[...].astype(jnp.float32)
    o_ref[...] = y.astype(o_ref.dtype)


def fctp_projection(node_input, node_attr, w_full, bias_full, *, tn=4096):
    """out[n, :] = (node_input[n] @ W_full) * node_attr[n, 0] + bias_full."""
    N, Din = node_input.shape
    Dout = w_full.shape[1]
    dtype = node_input.dtype

    # attr / bias are tiny: keep them f32 in HBM and in the epilogue.
    node_attr = node_attr.reshape(N, 1).astype(jnp.float32)
    bias_full = bias_full.reshape(1, Dout).astype(jnp.float32)

    # Node tile: multiple of 128, capped so that (a) we never allocate a tile
    # wildly bigger than N and (b) there are >= 2 grid steps whenever N > 128
    # so the "parallel" axis can shard across both TensorCores on v7x.
    tn = 128 * max(1, int(tn) // 128)
    tn_cap = 128 * max(1, pl.cdiv(N, 2 * 128))
    tn = max(128, min(tn, tn_cap))
    grid_n = pl.cdiv(N, tn)   # ragged tail handled by Pallas (no jnp.pad)

    out = pl.pallas_call(
        fctp_kernel,
        out_shape=jax.ShapeDtypeStruct((N, Dout), dtype),
        grid_spec=pltpu.PrefetchScalarGridSpec(
            num_scalar_prefetch=0,
            grid=(grid_n,),
            in_specs=[
                pl.BlockSpec((tn, Din), lambda i: (i, 0)),    # x tile (streamed)
                pl.BlockSpec((tn, 1), lambda i: (i, 0)),      # attr tile (streamed)
                pl.BlockSpec((Din, Dout), lambda i: (0, 0)),  # W (resident)
                pl.BlockSpec((1, Dout), lambda i: (0, 0)),    # bias (resident)
            ],
            out_specs=pl.BlockSpec((tn, Dout), lambda i: (i, 0)),
        ),
        compiler_params=pltpu.CompilerParams(
            dimension_semantics=("parallel",),
        ),
    )(node_input, node_attr, w_full, bias_full)

    return out


# --------------------------- parameter construction -------------------------
def build_params(key, irreps_in, irreps_out, dtype=jnp.float32):
    """Deterministic synthetic init of the FCTP path weights + scalar bias.

    Returns:
      path_ws: dict {(i_in, i_out): W[mul_in, mul_out]} for matching-l paths
      w_full:  [Din, Dout] block-diagonal expanded weight (kron with I_{2l+1})
      bias_full: [1, Dout] bias, nonzero only on 0e output slices
    """
    Din, Dout = irreps_dim(irreps_in), irreps_dim(irreps_out)
    w_full = np.zeros((Din, Dout), np.float32)
    path_ws = {}

    off_in = 0
    for i_in, (mul_in, l_in) in enumerate(irreps_in):
        dim_in = mul_in * (2 * l_in + 1)
        off_out = 0
        for i_out, (mul_out, l_out) in enumerate(irreps_out):
            dim_out = mul_out * (2 * l_out + 1)
            if l_in == l_out:
                k = jax.random.fold_in(key, 1000 * i_in + i_out)
                # rescale=True in Equiformer: weights scaled by 1/sqrt(fan_in).
                w = np.asarray(
                    jax.random.normal(k, (mul_in, mul_out), jnp.float32)
                ) / np.sqrt(mul_in)
                path_ws[(i_in, i_out)] = jnp.asarray(w, jnp.float32)
                w_full[off_in:off_in + dim_in, off_out:off_out + dim_out] = np.kron(
                    w, np.eye(2 * l_in + 1, dtype=np.float32)
                )
            off_out += dim_out
        off_in += dim_in

    # bias only on scalar (0e) output channels (e3nn / Equiformer convention)
    bias_full = np.zeros((1, Dout), np.float32)
    off_out = 0
    for i_out, (mul_out, l_out) in enumerate(irreps_out):
        dim_out = mul_out * (2 * l_out + 1)
        if l_out == 0:
            kb = jax.random.fold_in(key, 777 + i_out)
            bias_full[0, off_out:off_out + dim_out] = np.asarray(
                jax.random.normal(kb, (mul_out,), jnp.float32)
            )
        off_out += dim_out

    return path_ws, jnp.asarray(w_full, dtype), jnp.asarray(bias_full, jnp.float32)


# ------------------------------- reference ----------------------------------
def fctp_reference(node_input, node_attr, path_ws, irreps_in, irreps_out, bias_full):
    """Pure-JAX reference mimicking the e3nn per-path tensor-product structure."""
    N = node_input.shape[0]
    Dout = irreps_dim(irreps_out)
    out = jnp.zeros((N, Dout), node_input.dtype)

    in_offsets, o = [], 0
    for mul, l in irreps_in:
        in_offsets.append(o)
        o += mul * (2 * l + 1)
    out_offsets, o = [], 0
    for mul, l in irreps_out:
        out_offsets.append(o)
        o += mul * (2 * l + 1)

    for (i_in, i_out), w in path_ws.items():
        mul_in, l = irreps_in[i_in]
        mul_out, _ = irreps_out[i_out]
        d = 2 * l + 1
        x = node_input[:, in_offsets[i_in]:in_offsets[i_in] + mul_in * d]
        x = x.reshape(N, mul_in, d)
        # (l x 0e -> l) path: CG 1/sqrt(2l+1) cancels with 'component' norm.
        y = jnp.einsum("nud,uv->nvd", x, w)
        out = out.at[:, out_offsets[i_out]:out_offsets[i_out] + mul_out * d].add(
            y.reshape(N, mul_out * d)
        )
    out = out * node_attr  # 1x0e attribute scalar
    out = out + bias_full
    return out


# ---------------------------------- main -------------------------------------
if __name__ == "__main__":
    key = jax.random.PRNGKey(0)
    k_x, k_a, k_w = jax.random.split(key, 3)

    # Small but multi-tile: N=200 -> tn clamps to 128, grid of 2 steps with a
    # ragged last tile (exercises the no-pad path and the v7x 2-step rule).
    N = 200
    Din, Dout = irreps_dim(IRREPS_IN), irreps_dim(IRREPS_OUT)

    node_input = jax.random.normal(k_x, (N, Din), jnp.float32)
    # In deq2ff node_attr is ones ('1x0e'); use random scalars to exercise the
    # broadcast exactly as the tensor product would.
    node_attr = jax.random.uniform(k_a, (N, 1), jnp.float32, 0.5, 1.5)

    path_ws, w_full, bias_full = build_params(k_w, IRREPS_IN, IRREPS_OUT)

    # --- f32 run + correctness check ---
    out = fctp_projection(node_input, node_attr, w_full, bias_full)
    out = jax.block_until_ready(out)

    ref = fctp_reference(node_input, node_attr, path_ws, IRREPS_IN, IRREPS_OUT, bias_full)
    np.testing.assert_allclose(np.asarray(out), np.asarray(ref), rtol=1e-4, atol=1e-4)

    # --- bf16 storage for x / W (halves dominant HBM stream); attr/bias stay
    # --- f32 and the kernel still accumulates in f32.
    xi_bf = node_input.astype(jnp.bfloat16)
    w_bf = w_full.astype(jnp.bfloat16)
    out_bf = fctp_projection(xi_bf, node_attr, w_bf, bias_full)
    out_bf = jax.block_until_ready(out_bf)
    ref_bf = (xi_bf.astype(jnp.float32) @ w_bf.astype(jnp.float32)) \
        * node_attr + bias_full
    np.testing.assert_allclose(
        np.asarray(out_bf, dtype=np.float32), np.asarray(ref_bf),
        rtol=5e-2, atol=5e-2,
    )

    print("KERNEL_OK")
</pallas_src>

<mosaic_0001>
module attributes {stable_mosaic.version = 11 : i64} {
  func.func @fctp_kernel(%arg0: i32, %arg1: memref<128x40xf32, #tpu.memory_space<vmem>>, %arg2: memref<128x1xf32, #tpu.memory_space<vmem>>, %arg3: memref<40x20xf32, #tpu.memory_space<vmem>>, %arg4: memref<1x20xf32, #tpu.memory_space<vmem>>, %arg5: memref<128x20xf32, #tpu.memory_space<vmem>>) attributes {dimension_semantics = [#tpu.dimension_semantics<parallel>], iteration_bounds = array<i64: 2>, scalar_prefetch = 0 : i64, scratch_operands = 0 : i64, tpu.core_type = #tpu.core_type<tc>, window_params = [{transform_indices = @transform_0, window_bounds = array<i64: 128, 40>}, {transform_indices = @transform_1, window_bounds = array<i64: 128, 1>}, {pipeline_mode = #tpu.pipeline_mode<synchronous>, transform_indices = @transform_2, window_bounds = array<i64: 40, 20>}, {pipeline_mode = #tpu.pipeline_mode<synchronous>, transform_indices = @transform_3, window_bounds = array<i64: 1, 20>}, {transform_indices = @transform_4, window_bounds = array<i64: 128, 20>}]} {
    %c0 = arith.constant 0 : index
    %c0_0 = arith.constant 0 : index
    %0 = vector.load %arg1[%c0, %c0_0] : memref<128x40xf32, #tpu.memory_space<vmem>>, vector<128x40xf32>
    %c0_1 = arith.constant 0 : index
    %c0_2 = arith.constant 0 : index
    %1 = vector.load %arg3[%c0_1, %c0_2] : memref<40x20xf32, #tpu.memory_space<vmem>>, vector<40x20xf32>
    %cst = arith.constant dense<0.000000e+00> : vector<128x20xf32>
    %2 = tpu.matmul %0, %1, %cst {dimension_numbers = #tpu.dot_dimension_numbers<[1], [0], [0], [1], [0, 0, 1, 1], [], []>} : vector<128x40xf32>, vector<40x20xf32>, vector<128x20xf32> -> vector<128x20xf32>
    %c0_3 = arith.constant 0 : index
    %c0_4 = arith.constant 0 : index
    %3 = vector.load %arg2[%c0_3, %c0_4] : memref<128x1xf32, #tpu.memory_space<vmem>>, vector<128x1xf32>
    %4 = vector.broadcast %3 : vector<128x1xf32> to vector<128x20xf32>
    %5 = arith.mulf %2, %4 : vector<128x20xf32>
    %c0_5 = arith.constant 0 : index
    %c0_6 = arith.constant 0 : index
    %6 = vector.load %arg4[%c0_5, %c0_6] : memref<1x20xf32, #tpu.memory_space<vmem>>, vector<1x20xf32>
    %7 = vector.broadcast %6 : vector<1x20xf32> to vector<128x20xf32>
    %8 = arith.addf %5, %7 : vector<128x20xf32>
    %c0_7 = arith.constant 0 : index
    %c0_8 = arith.constant 0 : index
    %9 = vector.load %arg5[%c0_7, %c0_8] : memref<128x20xf32, #tpu.memory_space<vmem>>, vector<128x20xf32>
    tpu.vector_store %arg5[%c0_7, %c0_8], %8 {strides = array<i32>} : memref<128x20xf32, #tpu.memory_space<vmem>>, vector<128x20xf32>,
    return
  }
  func.func @transform_0(%arg0: i32) -> (i32, i32) {
    %c0_i32 = arith.constant 0 : i32
    %c0_i32_0 = arith.constant 0 : i32
    return %arg0, %c0_i32 : i32, i32
  }
  func.func @transform_1(%arg0: i32) -> (i32, i32) {
    %c0_i32 = arith.constant 0 : i32
    %c0_i32_0 = arith.constant 0 : i32
    return %arg0, %c0_i32 : i32, i32
  }
  func.func @transform_2(%arg0: i32) -> (i32, i32) {
    %c0_i32 = arith.constant 0 : i32
    %c0_i32_0 = arith.constant 0 : i32
    %c0_i32_1 = arith.constant 0 : i32
    return %c0_i32, %c0_i32_0 : i32, i32
  }
  func.func @transform_3(%arg0: i32) -> (i32, i32) {
    %c0_i32 = arith.constant 0 : i32
    %c0_i32_0 = arith.constant 0 : i32
    %c0_i32_1 = arith.constant 0 : i32
    return %c0_i32, %c0_i32_0 : i32, i32
  }
  func.func @transform_4(%arg0: i32) -> (i32, i32) {
    %c0_i32 = arith.constant 0 : i32
    %c0_i32_0 = arith.constant 0 : i32
    return %arg0, %c0_i32 : i32, i32
  }
}

</mosaic_0001>

<llo_original>
// kernel: tpu_custom_call.1
$region0: #{tpu_custom_call.1}
  #allocation0 [shape = 'u32[]', space=smem, size = 0x4, offset = 0x4, fixed_abs, tag = 'smem constant byte address 0x4 - core index']
  #allocation1 [shape = 'u32[144,128]{1,0:T(1,128)}', space=vmem, size = 0x12000, scoped, tag = 'internal scratch']
  %s0 = inlined_call_operand.vmem [shape: f32[200,40], index: 0, kind: input, shape index: {}]
  %s1 = inlined_call_operand.vmem [shape: f32[200,1], index: 1, kind: input, shape index: {}]
  %s2 = inlined_call_operand.vmem [shape: f32[40,20], index: 2, kind: input, shape index: {}]
  %s3 = inlined_call_operand.vmem [shape: f32[1,20], index: 3, kind: input, shape index: {}]
  %s4 = inlined_call_operand.vmem [shape: f32[200,20], index: 4, kind: output, shape index: {}]
  %s5 = sld [smem:[#allocation0]]
  $region97: #{tpu_custom_call.1} parent=0
    _
  %s7 = ssub.s32 1, %s5
  %s8 = scalar_select 0, %s7, %s5
  $region1: #{tpu_custom_call.1} parent=0
    #allocation2 [shape = 'u8[131072]{0}', space=vmem, size = 0x20000, scoped, tag = 'output window, operand 0']
    loop: start=0, step=1, limit=4
    $region2: #{tpu_custom_call.1} parent=1 // loop_pre_header
      _
    $region3: #{tpu_custom_call.1} parent=1 // loop_header
      %s10 = sphi 0, %s14
      %p11 = scmp.ge.s32.totalorder %s10, 4
      %s20 = sphi 0, %s22
      %s23 = sphi 0, %s20
      %s24 = sphi 0, %s23
      %s40 = sphi 0, %s24
      %s46 = sphi 0, %s48
      %s49 = sphi 0, %s46
      %s50 = sphi 0, %s49
      %s66 = sphi 0, %s50
      %s70 = sphi 0, %s70
      %s72 = sphi 0, %s70
      %s73 = sphi 0, %s72
      %s87 = sphi 0, %s73
      %s91 = sphi 0, %s91
      %s93 = sphi 0, %s91
      %s94 = sphi 0, %s93
      %s108 = sphi 0, %s94
      %s114 = sphi 0, %s116
      %s117 = sphi 0, %s114
      %s118 = sphi 0, %s117
      %s134 = sphi 0, %s118
    $region4: #{tpu_custom_call.1} parent=1 // loop_header_branch
      %13 = sbr.rel (%p11) target = $region8
    $region5: #{tpu_custom_call.1} parent=1 // loop_body
      %s15 = ssub.s32 %s10, 1
      %s16 = ssub.s32 %s10, 2
      %s17 = sadd.s32 %s10, 1
      %s18 = ssub.s32 %s10, %s17
      %p19 = scmp.eq.s32.totalorder %s18, 0
      %s21 = sadd.s32 %s20, 1
      %s22 = scalar_select %p19, %s20, %s21
      %p25 = pneg %p19
      %p26 = scmp.eq.s32.totalorder %s10, 1
      %p27 = por %p25, %p26
      %p28 = scmp.ne.s32.totalorder %s20, %s23
      %p29 = scmp.eq.s32.totalorder %s10, 0
      %p30 = por %p28, %p29
      %p31 = scmp.ne.s32.totalorder %s20, %s23
      %p32 = scmp.eq.s32.totalorder %s15, 1
      %p33 = por %p31, %p32
      %p34 = scmp.ne.s32.totalorder %s23, %s24
      %p35 = scmp.eq.s32.totalorder %s15, 0
      %p36 = por %p34, %p35
      %p37 = scmp.ne.s32.totalorder %s23, %s24
      %p38 = scmp.eq.s32.totalorder %s16, 1
      %p39 = por %p37, %p38
      %p41 = scmp.ne.s32.totalorder %s24, %s40
      %p42 = scmp.eq.s32.totalorder %s16, 0
      %p43 = por %p41, %p42
      %s44 = ssub.s32 %s10, %s17
      %p45 = scmp.eq.s32.totalorder %s44, 0
      %s47 = sadd.s32 %s46, 1
      %s48 = scalar_select %p45, %s46, %s47
      %p51 = pneg %p45
      %p52 = scmp.eq.s32.totalorder %s10, 1
      %p53 = por %p51, %p52
      %p54 = scmp.ne.s32.totalorder %s46, %s49
      %p55 = scmp.eq.s32.totalorder %s10, 0
      %p56 = por %p54, %p55
      %p57 = scmp.ne.s32.totalorder %s46, %s49
      %p58 = scmp.eq.s32.totalorder %s15, 1
      %p59 = por %p57, %p58
      %p60 = scmp.ne.s32.totalorder %s49, %s50
      %p61 = scmp.eq.s32.totalorder %s15, 0
      %p62 = por %p60, %p61
      %p63 = scmp.ne.s32.totalorder %s49, %s50
      %p64 = scmp.eq.s32.totalorder %s16, 1
      %p65 = por %p63, %p64
      %p67 = scmp.ne.s32.totalorder %s50, %s66
      %p68 = scmp.eq.s32.totalorder %s16, 0
      %p69 = por %p67, %p68
      %s71 = sadd.s32 %s70, 1
      %p74 = scmp.eq.s32.totalorder %s10, 1
      %p75 = scmp.ne.s32.totalorder %s70, %s72
      %p76 = scmp.eq.s32.totalorder %s10, 0
      %p77 = por %p75, %p76
      %p78 = scmp.ne.s32.totalorder %s70, %s72
      %p79 = scmp.eq.s32.totalorder %s15, 1
      %p80 = por %p78, %p79
      %p81 = scmp.ne.s32.totalorder %s72, %s73
      %p82 = scmp.eq.s32.totalorder %s15, 0
      %p83 = por %p81, %p82
      %p84 = scmp.ne.s32.totalorder %s72, %s73
      %p85 = scmp.eq.s32.totalorder %s16, 1
      %p86 = por %p84, %p85
      %p88 = scmp.ne.s32.totalorder %s73, %s87
      %p89 = scmp.eq.s32.totalorder %s16, 0
      %p90 = por %p88, %p89
      %s92 = sadd.s32 %s91, 1
      %p95 = scmp.eq.s32.totalorder %s10, 1
      %p96 = scmp.ne.s32.totalorder %s91, %s93
      %p97 = scmp.eq.s32.totalorder %s10, 0
      %p98 = por %p96, %p97
      %p99 = scmp.ne.s32.totalorder %s91, %s93
      %p100 = scmp.eq.s32.totalorder %s15, 1
      %p101 = por %p99, %p100
      %p102 = scmp.ne.s32.totalorder %s93, %s94
      %p103 = scmp.eq.s32.totalorder %s15, 0
      %p104 = por %p102, %p103
      %p105 = scmp.ne.s32.totalorder %s93, %s94
      %p106 = scmp.eq.s32.totalorder %s16, 1
      %p107 = por %p105, %p106
      %p109 = scmp.ne.s32.totalorder %s94, %s108
      %p110 = scmp.eq.s32.totalorder %s16, 0
      %p111 = por %p109, %p110
      %s112 = ssub.s32 %s10, %s17
      %p113 = scmp.eq.s32.totalorder %s112, 0
      %s115 = sadd.s32 %s114, 1
      %s116 = scalar_select %p113, %s114, %s115
      %p119 = pneg %p113
      %p120 = scmp.eq.s32.totalorder %s10, 1
      %p121 = por %p119, %p120
      %p122 = scmp.ne.s32.totalorder %s114, %s117
      %p123 = scmp.eq.s32.totalorder %s10, 0
      %p124 = por %p122, %p123
      %p125 = scmp.ne.s32.totalorder %s114, %s117
      %p126 = scmp.eq.s32.totalorder %s15, 1
      %p127 = por %p125, %p126
      %p128 = scmp.ne.s32.totalorder %s117, %s118
      %p129 = scmp.eq.s32.totalorder %s15, 0
      %p130 = por %p128, %p129
      %p131 = scmp.ne.s32.totalorder %s117, %s118
      %p132 = scmp.eq.s32.totalorder %s16, 1
      %p133 = por %p131, %p132
      %p135 = scmp.ne.s32.totalorder %s118, %s134
      %p136 = scmp.eq.s32.totalorder %s16, 0
      %p137 = por %p135, %p136
      %p138 = scmp.le.s32.totalorder 1, %s10
      %p139 = scmp.lt.s32.totalorder %s10, 3
      %p140 = pnand %p138, %p139
      %p141 = pneg %p140
      // Predicated region
      $region9: #{tpu_custom_call.1} parent=5 // pred_check
        _
      $region10: #{tpu_custom_call.1} parent=5 // pred_check_branch
        %143 = sbr.rel (%p140) target = $region12
      $region11: #{tpu_custom_call.1} parent=5 // pred_region
        %s144 = ssub.s32 %s10, 1
        // Predicated region
        $region13: #{tpu_custom_call.1} parent=11 // pred_check
          %p145 = pneg %p83
        $region14: #{tpu_custom_call.1} parent=11 // pred_check_branch
          %147 = sbr.rel (%p145) target = $region16
        $region15: #{tpu_custom_call.1} parent=11 // pred_region
          _
        $region16: #{tpu_custom_call.1} parent=11 // pred_fallthru
          _
        // Predicated region
        $region17: #{tpu_custom_call.1} parent=11 // pred_check
          %p148 = pneg %p104
        $region18: #{tpu_custom_call.1} parent=11 // pred_check_branch
          %150 = sbr.rel (%p148) target = $region20
        $region19: #{tpu_custom_call.1} parent=11 // pred_region
          _
        $region20: #{tpu_custom_call.1} parent=11 // pred_fallthru
          _
      $region12: #{tpu_custom_call.1} parent=5 // pred_fallthru
        _
      %p151 = scmp.lt.s32.totalorder %s10, 2
      // Predicated region
      $region21: #{tpu_custom_call.1} parent=5 // pred_check
        %p152 = pneg %p151
      $region22: #{tpu_custom_call.1} parent=5 // pred_check_branch
        %154 = sbr.rel (%p152) target = $region24
      $region23: #{tpu_custom_call.1} parent=5 // pred_region
        // Predicated region
        $region25: #{tpu_custom_call.1} parent=23 // pred_check
          %p155 = pneg %p30
        $region26: #{tpu_custom_call.1} parent=23 // pred_check_branch
          %157 = sbr.rel (%p155) target = $region28
        $region27: #{tpu_custom_call.1} parent=23 // pred_region
          %s158 = smul.u32 16, %s10
          %s159 = ssub.s32 25, %s158
          %p160 = scmp.lt.s32.totalorder %s159, 16
          %s161 = scalar_select %p160, %s159, 16
          %s162 = smul.u32 128, %s161
          %p163 = scmp.lt.s32.totalorder %s158, 24
          %s164 = scalar_select %p163, %s158, 24
          %s165 = smul.addr %s164, 8
          %s166 = scalar_lea.vmem %s0, %s165
          %s167 = smul.u32 16, %s10
          %s168 = ssub.s32 25, %s167
          %p169 = scmp.lt.s32.totalorder %s168, 16
          %s170 = scalar_select %p169, %s168, 16
          %s171 = smul.u32 128, %s170
        $region28: #{tpu_custom_call.1} parent=23 // pred_fallthru
          _
        // Predicated region
        $region29: #{tpu_custom_call.1} parent=23 // pred_check
          %p172 = pneg %p56
        $region30: #{tpu_custom_call.1} parent=23 // pred_check_branch
          %174 = sbr.rel (%p172) target = $region32
        $region31: #{tpu_custom_call.1} parent=23 // pred_region
          %s175 = smul.u32 16, %s10
          %s176 = ssub.s32 25, %s175
          %p177 = scmp.lt.s32.totalorder %s176, 16
          %s178 = scalar_select %p177, %s176, 16
          %s179 = smul.u32 128, %s178
          %p180 = scmp.lt.s32.totalorder %s175, 24
          %s181 = scalar_select %p180, %s175, 24
          %s182 = smul.addr %s181, 8
          %s183 = scalar_lea.vmem %s1, %s182
          %s184 = smul.u32 16, %s10
          %s185 = ssub.s32 25, %s184
          %p186 = scmp.lt.s32.totalorder %s185, 16
          %s187 = scalar_select %p186, %s185, 16
          %s188 = smul.u32 128, %s187
        $region32: #{tpu_custom_call.1} parent=23 // pred_fallthru
          _
      $region24: #{tpu_custom_call.1} parent=5 // pred_fallthru
        _
      %p189 = scmp.le.s32.totalorder 1, %s10
      %p190 = scmp.lt.s32.totalorder %s10, 3
      %p191 = pnand %p189, %p190
      %p192 = pneg %p191
      // Predicated region
      $region33: #{tpu_custom_call.1} parent=5 // pred_check
        _
      $region34: #{tpu_custom_call.1} parent=5 // pred_check_branch
        %194 = sbr.rel (%p191) target = $region36
      $region35: #{tpu_custom_call.1} parent=5 // pred_region
        %s195 = ssub.s32 %s10, 1
        %s196 = smul.u32 16, %s15
        %s197 = ssub.s32 25, %s196
        %p198 = scmp.lt.s32.totalorder %s197, 16
        %s199 = scalar_select %p198, %s197, 16
        %s200 = smul.u32 128, %s199
        %p201 = scmp.lt.s32.totalorder %s196, 24
        %s202 = scalar_select %p201, %s196, 24
        %s203 = smul.addr %s202, 8
        %s204 = scalar_lea.vmem %s0, %s203
        %p205 = pneg %p36
        %p206 = pneg %p33
        %s207 = smul.u32 16, %s15
        %s208 = ssub.s32 25, %s207
        %p209 = scmp.lt.s32.totalorder %s208, 16
        %s210 = scalar_select %p209, %s208, 16
        %s211 = smul.u32 128, %s210
        %p212 = scmp.lt.s32.totalorder %s207, 24
        %s213 = scalar_select %p212, %s207, 24
        %s214 = smul.addr %s213, 8
        %s215 = scalar_lea.vmem %s1, %s214
        %p216 = pneg %p62
        %p217 = pneg %p59
        %p218 = pneg %p83
        %p219 = pneg %p80
        %p220 = pneg %p104
        %p221 = pneg %p101
        %p222 = pneg %p130
        %p223 = pneg %p127
        %s224 = sand.u32 %s117, 1
        %s225 = sand.u32 %s117, 1
        %s226 = smul.addr %s225, 128
        %s227 = scalar_lea.vmem [#allocation2], %s226
        %s228 = smul.u32 16, %s15
        %s229 = ssub.s32 25, %s228
        %p230 = scmp.lt.s32.totalorder %s229, 16
        %s231 = scalar_select %p230, %s229, 16
        %s232 = smul.u32 128, %s231
        %p233 = scmp.lt.s32.totalorder %s228, 24
        %s234 = scalar_select %p233, %s228, 24
        %s235 = smul.addr %s234, 8
        %s236 = scalar_lea.vmem %s0, %s235
        %s237 = smul.u32 16, %s15
        %s238 = ssub.s32 25, %s237
        %p239 = scmp.lt.s32.totalorder %s238, 16
        %s240 = scalar_select %p239, %s238, 16
        %s241 = smul.u32 128, %s240
        %s242 = smul.u32 16, %s15
        %s243 = ssub.s32 25, %s242
        %p244 = scmp.lt.s32.totalorder %s243, 16
        %s245 = scalar_select %p244, %s243, 16
        %s246 = smul.u32 128, %s245
        %p247 = scmp.lt.s32.totalorder %s242, 24
        %s248 = scalar_select %p247, %s242, 24
        %s249 = smul.addr %s248, 8
        %s250 = scalar_lea.vmem %s1, %s249
        %s251 = smul.u32 16, %s15
        %s252 = ssub.s32 25, %s251
        %p253 = scmp.lt.s32.totalorder %s252, 16
        %s254 = scalar_select %p253, %s252, 16
        %s255 = smul.u32 128, %s254
        %s256 = smul.u32 16, %s15
        %s257 = ssub.s32 25, %s256
        %p258 = scmp.lt.s32.totalorder %s257, 16
        %s259 = scalar_select %p258, %s257, 16
        %s260 = smul.u32 128, %s259
        %v261 = vld [vmem:[%s236] sm:$0xff]
        %v262 = vld [vmem:[%s236 + $0x8] sm:$0xff]
        %v263 = vld [vmem:[%s236 + $0x10] sm:$0xff]
        %v264 = vld [vmem:[%s236 + $0x18] sm:$0xff]
        %v265 = vld [vmem:[%s236 + $0x20] sm:$0xff]
        %v266 = vld [vmem:[%s236 + $0x28] sm:$0xff]
        %v267 = vld [vmem:[%s236 + $0x30] sm:$0xff]
        %v268 = vld [vmem:[%s236 + $0x38] sm:$0xff]
        %v269 = vld [vmem:[%s236 + $0x40] sm:$0xff]
        %v270 = vld [vmem:[%s236 + $0x48] sm:$0xff]
        %v271 = vld [vmem:[%s236 + $0x50] sm:$0xff]
        %v272 = vld [vmem:[%s236 + $0x58] sm:$0xff]
        %v273 = vld [vmem:[%s236 + $0x60] sm:$0xff]
        %v274 = vld [vmem:[%s236 + $0x68] sm:$0xff]
        %v275 = vld [vmem:[%s236 + $0x70] sm:$0xff]
        %v276 = vld [vmem:[%s236 + $0x78] sm:$0xff]
        %v277 = vld [vmem:[%s2] sm:$0xff]
        %v278 = vld [vmem:[%s2 + $0x8] sm:$0xff]
        %v279 = vld [vmem:[%s2 + $0x10] sm:$0xff]
        %v280 = vld [vmem:[%s2 + $0x18] sm:$0xff]
        %v281 = vld [vmem:[%s2 + $0x20] sm:$0xff]
        %vm282 = vcmask 326656
        %v284 = vsel %vm282, %v261, 0
        %v287 = vsel %vm282, %v262, 0
        %v290 = vsel %vm282, %v263, 0
        %v293 = vsel %vm282, %v264, 0
        %v296 = vsel %vm282, %v265, 0
        %v299 = vsel %vm282, %v266, 0
        %v302 = vsel %vm282, %v267, 0
        %v305 = vsel %vm282, %v268, 0
        %v308 = vsel %vm282, %v269, 0
        %v311 = vsel %vm282, %v270, 0
        %v314 = vsel %vm282, %v271, 0
        %v317 = vsel %vm282, %v272, 0
        %v320 = vsel %vm282, %v273, 0
        %v323 = vsel %vm282, %v274, 0
        %v326 = vsel %vm282, %v275, 0
        %v329 = vsel %vm282, %v276, 0
        %331 = vmatprep.subr.mxu0 0.0
        %332 = vmatpush1.msra.mxu0 0.0
        %333 = vmatprep.subr.mxu0 0.0
        %334 = vmatpush1.msra.mxu0 0.0
        %335 = vmatprep.subr.mxu0 0.0
        %336 = vmatpush1.msra.mxu0 0.0
        %337 = vmatprep.subr.mxu0 0.0
        %338 = vmatpush1.msra.mxu0 0.0
        %339 = vmatprep.subr.mxu0 0.0
        %340 = vmatpush1.msra.mxu0 0.0
        %341 = vmatprep.subr.mxu0 0.0
        %342 = vmatpush1.msra.mxu0 0.0
        %343 = vmatprep.subr.mxu0 0.0
        %344 = vmatpush1.msra.mxu0 0.0
        %345 = vmatprep.subr.mxu0 0.0
        %346 = vmatpush1.msra.mxu0 0.0
        %347 = vmatprep.subr.mxu0 0.0
        %348 = vmatpush1.msra.mxu0 0.0
        %349 = vmatprep.subr.mxu0 0.0
        %350 = vmatpush1.msra.mxu0 0.0
        %351 = vmatprep.subr.mxu0 0.0
        %352 = vmatpush1.msra.mxu0 0.0
        %353 = vmatprep.subr.mxu0 0.0
        %354 = vmatpush1.msra.mxu0 %v281
        %355 = vmatprep.subr.mxu0 0.0
        %356 = vmatpush1.msra.mxu0 %v280
        %357 = vmatprep.subr.mxu0 0.0
        %358 = vmatpush1.msra.mxu0 %v279
        %359 = vmatprep.subr.mxu0 0.0
        %360 = vmatpush1.msra.mxu0 %v278
        %361 = vmatprep.subr.mxu0 0.0
        %362 = vmatpush1.msra.mxu0 %v277
        %363 = vmatprep.subr.mxu0 0.0
        %364 = vmatpush2.msra.mxu0 0.0
        %365 = vmatprep.subr.mxu0 0.0
        %366 = vmatpush2.msra.mxu0 0.0
        %367 = vmatprep.subr.mxu0 0.0
        %368 = vmatpush2.msra.mxu0 0.0
        %369 = vmatprep.subr.mxu0 0.0
        %370 = vmatpush2.msra.mxu0 0.0
        %371 = vmatprep.subr.mxu0 0.0
        %372 = vmatpush2.msra.mxu0 0.0
        %373 = vmatprep.subr.mxu0 0.0
        %374 = vmatpush2.msra.mxu0 0.0
        %375 = vmatprep.subr.mxu0 0.0
        %376 = vmatpush2.msra.mxu0 0.0
        %377 = vmatprep.subr.mxu0 0.0
        %378 = vmatpush2.msra.mxu0 0.0
        %379 = vmatprep.subr.mxu0 0.0
        %380 = vmatpush2.msra.mxu0 0.0
        %381 = vmatprep.subr.mxu0 0.0
        %382 = vmatpush2.msra.mxu0 0.0
        %383 = vmatprep.subr.mxu0 0.0
        %384 = vmatpush2.msra.mxu0 0.0
        %385 = vmatprep.subr.mxu0 0.0
        %386 = vmatpush2.msra.mxu0 0.0
        %387 = vmatprep.subr.mxu0 0.0
        %388 = vmatpush2.msra.mxu0 0.0
        %389 = vmatprep.subr.mxu0 0.0
        %390 = vmatpush2.msra.mxu0 0.0
        %391 = vmatprep.subr.mxu0 0.0
        %392 = vmatpush2.msra.mxu0 0.0
        %393 = vmatprep.subr.mxu0 0.0
        %394 = vmatpush2.msra.mxu0 0.0
        %395 = vmatprep.mubr.f32.mxu0 0.0
        %396 = vmatmul.mubr.f32.gmra.mxu0 %v284
        %v397 = vpop.f32.mrf.mxu0
        %v398 = vadd.f32 0.0, %v397
        %v399 = vpop.f32.mrf.mxu0
        %400 = vmatprep.mubr.f32.mxu0 0.0
        %401 = vmatmul.mubr.f32.gmra.mxu0 %v287
        %v402 = vpop.f32.mrf.mxu0
        %v403 = vadd.f32 0.0, %v402
        %v404 = vpop.f32.mrf.mxu0
        %405 = vmatprep.mubr.f32.mxu0 0.0
        %406 = vmatmul.mubr.f32.gmra.mxu0 %v290
        %v407 = vpop.f32.mrf.mxu0
        %v408 = vadd.f32 0.0, %v407
        %v409 = vpop.f32.mrf.mxu0
        %410 = vmatprep.mubr.f32.mxu0 0.0
        %411 = vmatmul.mubr.f32.gmra.mxu0 %v293
        %v412 = vpop.f32.mrf.mxu0
        %v413 = vadd.f32 0.0, %v412
        %v414 = vpop.f32.mrf.mxu0
        %415 = vmatprep.mubr.f32.mxu0 0.0
        %416 = vmatmul.mubr.f32.gmra.mxu0 %v296
        %v417 = vpop.f32.mrf.mxu0
        %v418 = vadd.f32 0.0, %v417
        %v419 = vpop.f32.mrf.mxu0
        %420 = vmatprep.mubr.f32.mxu0 0.0
        %421 = vmatmul.mubr.f32.gmra.mxu0 %v299
        %v422 = vpop.f32.mrf.mxu0
        %v423 = vadd.f32 0.0, %v422
        %v424 = vpop.f32.mrf.mxu0
        %425 = vmatprep.mubr.f32.mxu0 0.0
        %426 = vmatmul.mubr.f32.gmra.mxu0 %v302
        %v427 = vpop.f32.mrf.mxu0
        %v428 = vadd.f32 0.0, %v427
        %v429 = vpop.f32.mrf.mxu0
        %430 = vmatprep.mubr.f32.mxu0 0.0
        %431 = vmatmul.mubr.f32.gmra.mxu0 %v305
        %v432 = vpop.f32.mrf.mxu0
        %v433 = vadd.f32 0.0, %v432
        %v434 = vpop.f32.mrf.mxu0
        %435 = vmatprep.mubr.f32.mxu0 0.0
        %436 = vmatmul.mubr.f32.gmra.mxu0 %v308
        %v437 = vpop.f32.mrf.mxu0
        %v438 = vadd.f32 0.0, %v437
        %v439 = vpop.f32.mrf.mxu0
        %440 = vmatprep.mubr.f32.mxu0 0.0
        %441 = vmatmul.mubr.f32.gmra.mxu0 %v311
        %v442 = vpop.f32.mrf.mxu0
        %v443 = vadd.f32 0.0, %v442
        %v444 = vpop.f32.mrf.mxu0
        %445 = vmatprep.mubr.f32.mxu0 0.0
        %446 = vmatmul.mubr.f32.gmra.mxu0 %v314
        %v447 = vpop.f32.mrf.mxu0
        %v448 = vadd.f32 0.0, %v447
        %v449 = vpop.f32.mrf.mxu0
        %450 = vmatprep.mubr.f32.mxu0 0.0
        %451 = vmatmul.mubr.f32.gmra.mxu0 %v317
        %v452 = vpop.f32.mrf.mxu0
        %v453 = vadd.f32 0.0, %v452
        %v454 = vpop.f32.mrf.mxu0
        %455 = vmatprep.mubr.f32.mxu0 0.0
        %456 = vmatmul.mubr.f32.gmra.mxu0 %v320
        %v457 = vpop.f32.mrf.mxu0
        %v458 = vadd.f32 0.0, %v457
        %v459 = vpop.f32.mrf.mxu0
        %460 = vmatprep.mubr.f32.mxu0 0.0
        %461 = vmatmul.mubr.f32.gmra.mxu0 %v323
        %v462 = vpop.f32.mrf.mxu0
        %v463 = vadd.f32 0.0, %v462
        %v464 = vpop.f32.mrf.mxu0
        %465 = vmatprep.mubr.f32.mxu0 0.0
        %466 = vmatmul.mubr.f32.gmra.mxu0 %v326
        %v467 = vpop.f32.mrf.mxu0
        %v468 = vadd.f32 0.0, %v467
        %v469 = vpop.f32.mrf.mxu0
        %470 = vmatprep.mubr.f32.mxu0 0.0
        %471 = vmatmul.mubr.f32.gmra.mxu0 %v329
        %v472 = vpop.f32.mrf.mxu0
        %v473 = vadd.f32 0.0, %v472
        %v474 = vpop.f32.mrf.mxu0
        %475 = vdwg.mxu0
        %v476 = vld [vmem:[%s250] sm:$0xff]
        %v477 = vld [vmem:[%s250 + $0x8] sm:$0xff]
        %v478 = vld [vmem:[%s250 + $0x10] sm:$0xff]
        %v479 = vld [vmem:[%s250 + $0x18] sm:$0xff]
        %v480 = vld [vmem:[%s250 + $0x20] sm:$0xff]
        %v481 = vld [vmem:[%s250 + $0x28] sm:$0xff]
        %v482 = vld [vmem:[%s250 + $0x30] sm:$0xff]
        %v483 = vld [vmem:[%s250 + $0x38] sm:$0xff]
        %v484 = vld [vmem:[%s250 + $0x40] sm:$0xff]
        %v485 = vld [vmem:[%s250 + $0x48] sm:$0xff]
        %v486 = vld [vmem:[%s250 + $0x50] sm:$0xff]
        %v487 = vld [vmem:[%s250 + $0x58] sm:$0xff]
        %v488 = vld [vmem:[%s250 + $0x60] sm:$0xff]
        %v489 = vld [vmem:[%s250 + $0x68] sm:$0xff]
        %v490 = vld [vmem:[%s250 + $0x70] sm:$0xff]
        %v491 = vld [vmem:[%s250 + $0x78] sm:$0xff]
        %493 = vset.pattern.permute.xlu0 0
        %494 = vperm.xlu0 %493, %v476
        %v495 = vpop.permute.xlu0 %494
        %498 = vset.pattern.permute.xlu0 0
        %499 = vperm.xlu0 %498, %v477
        %v500 = vpop.permute.xlu0 %499
        %503 = vset.pattern.permute.xlu0 0
        %504 = vperm.xlu0 %503, %v478
        %v505 = vpop.permute.xlu0 %504
        %508 = vset.pattern.permute.xlu0 0
        %509 = vperm.xlu0 %508, %v479
        %v510 = vpop.permute.xlu0 %509
        %513 = vset.pattern.permute.xlu0 0
        %514 = vperm.xlu0 %513, %v480
        %v515 = vpop.permute.xlu0 %514
        %518 = vset.pattern.permute.xlu0 0
        %519 = vperm.xlu0 %518, %v481
        %v520 = vpop.permute.xlu0 %519
        %523 = vset.pattern.permute.xlu0 0
        %524 = vperm.xlu0 %523, %v482
        %v525 = vpop.permute.xlu0 %524
        %528 = vset.pattern.permute.xlu0 0
        %529 = vperm.xlu0 %528, %v483
        %v530 = vpop.permute.xlu0 %529
        %533 = vset.pattern.permute.xlu0 0
        %534 = vperm.xlu0 %533, %v484
        %v535 = vpop.permute.xlu0 %534
        %538 = vset.pattern.permute.xlu0 0
        %539 = vperm.xlu0 %538, %v485
        %v540 = vpop.permute.xlu0 %539
        %543 = vset.pattern.permute.xlu0 0
        %544 = vperm.xlu0 %543, %v486
        %v545 = vpop.permute.xlu0 %544
        %548 = vset.pattern.permute.xlu0 0
        %549 = vperm.xlu0 %548, %v487
        %v550 = vpop.permute.xlu0 %549
        %553 = vset.pattern.permute.xlu0 0
        %554 = vperm.xlu0 %553, %v488
        %v555 = vpop.permute.xlu0 %554
        %558 = vset.pattern.permute.xlu0 0
        %559 = vperm.xlu0 %558, %v489
        %v560 = vpop.permute.xlu0 %559
        %563 = vset.pattern.permute.xlu0 0
        %564 = vperm.xlu0 %563, %v490
        %v565 = vpop.permute.xlu0 %564
        %568 = vset.pattern.permute.xlu0 0
        %569 = vperm.xlu0 %568, %v491
        %v570 = vpop.permute.xlu0 %569
        %v572 = vmul.f32 %v398, %v495
        %v573 = vmul.f32 %v403, %v500
        %v574 = vmul.f32 %v408, %v505
        %v575 = vmul.f32 %v413, %v510
        %v576 = vmul.f32 %v418, %v515
        %v577 = vmul.f32 %v423, %v520
        %v578 = vmul.f32 %v428, %v525
        %v579 = vmul.f32 %v433, %v530
        %v580 = vmul.f32 %v438, %v535
        %v581 = vmul.f32 %v443, %v540
        %v582 = vmul.f32 %v448, %v545
        %v583 = vmul.f32 %v453, %v550
        %v584 = vmul.f32 %v458, %v555
        %v585 = vmul.f32 %v463, %v560
        %v586 = vmul.f32 %v468, %v565
        %v587 = vmul.f32 %v473, %v570
        %v588 = vld [vmem:[%s3] sm:$0x1]
        %v590 = vlaneseq
        %v591 = vshrl.u32 %v590, 7
        %v592 = vsub.s32 0, %v591
        %v593 = vrot.slane %v588, %v592
        %v595 = vadd.f32 %v572, %v593
        %v596 = vadd.f32 %v573, %v593
        %v597 = vadd.f32 %v574, %v593
        %v598 = vadd.f32 %v575, %v593
        %v599 = vadd.f32 %v576, %v593
        %v600 = vadd.f32 %v577, %v593
        %v601 = vadd.f32 %v578, %v593
        %v602 = vadd.f32 %v579, %v593
        %v603 = vadd.f32 %v580, %v593
        %v604 = vadd.f32 %v581, %v593
        %v605 = vadd.f32 %v582, %v593
        %v606 = vadd.f32 %v583, %v593
        %v607 = vadd.f32 %v584, %v593
        %v608 = vadd.f32 %v585, %v593
        %v609 = vadd.f32 %v586, %v593
        %v610 = vadd.f32 %v587, %v593
        %vm611 = vcmask 162816
        %612 = vst.msk [vmem:[%s227] sm:$0xff] %vm611, %v595
        %613 = vst.msk [vmem:[%s227 + $0x8] sm:$0xff] %vm611, %v596
        %614 = vst.msk [vmem:[%s227 + $0x10] sm:$0xff] %vm611, %v597
        %615 = vst.msk [vmem:[%s227 + $0x18] sm:$0xff] %vm611, %v598
        %616 = vst.msk [vmem:[%s227 + $0x20] sm:$0xff] %vm611, %v599
        %617 = vst.msk [vmem:[%s227 + $0x28] sm:$0xff] %vm611, %v600
        %618 = vst.msk [vmem:[%s227 + $0x30] sm:$0xff] %vm611, %v601
        %619 = vst.msk [vmem:[%s227 + $0x38] sm:$0xff] %vm611, %v602
        %620 = vst.msk [vmem:[%s227 + $0x40] sm:$0xff] %vm611, %v603
        %621 = vst.msk [vmem:[%s227 + $0x48] sm:$0xff] %vm611, %v604
        %622 = vst.msk [vmem:[%s227 + $0x50] sm:$0xff] %vm611, %v605
        %623 = vst.msk [vmem:[%s227 + $0x58] sm:$0xff] %vm611, %v606
        %624 = vst.msk [vmem:[%s227 + $0x60] sm:$0xff] %vm611, %v607
        %625 = vst.msk [vmem:[%s227 + $0x68] sm:$0xff] %vm611, %v608
        %626 = vst.msk [vmem:[%s227 + $0x70] sm:$0xff] %vm611, %v609
        %627 = vst.msk [vmem:[%s227 + $0x78] sm:$0xff] %vm611, %v610
        %s628 = sand.u32 %s117, 1
        %s629 = sand.u32 %s117, 1
        %s630 = smul.addr %s629, 128
        %s631 = scalar_lea.vmem [#allocation2], %s630
        // Predicated region
        $region37: #{tpu_custom_call.1} parent=35 // pred_check
          %p632 = pneg %p127
        $region38: #{tpu_custom_call.1} parent=35 // pred_check_branch
          %634 = sbr.rel (%p632) target = $region40
        $region39: #{tpu_custom_call.1} parent=35 // pred_region
          %s635 = smul.u32 16, %s15
          %s636 = ssub.s32 25, %s635
          %p637 = scmp.lt.s32.totalorder %s636, 16
          %s638 = scalar_select %p637, %s636, 16
          %s639 = smul.u32 128, %s638
          %p640 = scmp.ne.s32.totalorder 0, %s639
          %s641 = smul.addr %s635, 8
          %s642 = scalar_lea.vmem %s4, %s641
          // Predicated region
          $region41: #{tpu_custom_call.1} parent=39 // pred_check
            %p643 = pneg %p640
          $region42: #{tpu_custom_call.1} parent=39 // pred_check_branch
            %645 = sbr.rel (%p643) target = $region44
          $region43: #{tpu_custom_call.1} parent=39 // pred_region
            // Predicated region
            $region45: #{tpu_custom_call.1} parent=43 // pred_check
              _
            $region46: #{tpu_custom_call.1} parent=43 // pred_check_branch
              %647 = sbr.rel (0) target = $region48
            $region47: #{tpu_custom_call.1} parent=43 // pred_region
              // Predicated region
              $region67: #{tpu_custom_call.1} parent=47 // pred_check
                _
              $region68: #{tpu_custom_call.1} parent=47 // pred_check_branch
                %727 = sbr.rel (0) target = $region70
              $region69: #{tpu_custom_call.1} parent=47 // pred_region
                %s728 = sshrl.u32 %s638, 4
                // While loop
                $region71: #{tpu_custom_call.1} parent=69 // loop_pre_header
                  _
                $region72: #{tpu_custom_call.1} parent=69 // loop_header
                  %s730 = sphi 0, %s732
                  %p731 = scmp.ge.s32.totalorder %s730, %s728
                  %s735 = sphi 0, %s772
                  %s736 = sphi %s631, %s775
                  %s737 = sphi %s642, %s776
                $region73: #{tpu_custom_call.1} parent=69 // loop_header_branch
                  %734 = sbr.rel (%p731) target = $region77
                $region74: #{tpu_custom_call.1} parent=69 // loop_body
                  %v738 = vld [vmem:[%s736] sm:$0xff]
                  %739 = vst [vmem:[%s737] sm:$0xff] %v738
                  %v740 = vld [vmem:[%s736 + $0x8] sm:$0xff]
                  %741 = vst [vmem:[%s737 + $0x8] sm:$0xff] %v740
                  %v742 = vld [vmem:[%s736 + $0x10] sm:$0xff]
                  %743 = vst [vmem:[%s737 + $0x10] sm:$0xff] %v742
                  %v744 = vld [vmem:[%s736 + $0x18] sm:$0xff]
                  %745 = vst [vmem:[%s737 + $0x18] sm:$0xff] %v744
                  %v746 = vld [vmem:[%s736 + $0x20] sm:$0xff]
                  %747 = vst [vmem:[%s737 + $0x20] sm:$0xff] %v746
                  %v748 = vld [vmem:[%s736 + $0x28] sm:$0xff]
                  %749 = vst [vmem:[%s737 + $0x28] sm:$0xff] %v748
                  %v750 = vld [vmem:[%s736 + $0x30] sm:$0xff]
                  %751 = vst [vmem:[%s737 + $0x30] sm:$0xff] %v750
                  %v752 = vld [vmem:[%s736 + $0x38] sm:$0xff]
                  %753 = vst [vmem:[%s737 + $0x38] sm:$0xff] %v752
                  %v754 = vld [vmem:[%s736 + $0x40] sm:$0xff]
                  %755 = vst [vmem:[%s737 + $0x40] sm:$0xff] %v754
                  %v756 = vld [vmem:[%s736 + $0x48] sm:$0xff]
                  %757 = vst [vmem:[%s737 + $0x48] sm:$0xff] %v756
                  %v758 = vld [vmem:[%s736 + $0x50] sm:$0xff]
                  %759 = vst [vmem:[%s737 + $0x50] sm:$0xff] %v758
                  %v760 = vld [vmem:[%s736 + $0x58] sm:$0xff]
                  %761 = vst [vmem:[%s737 + $0x58] sm:$0xff] %v760
                  %v762 = vld [vmem:[%s736 + $0x60] sm:$0xff]
                  %763 = vst [vmem:[%s737 + $0x60] sm:$0xff] %v762
                  %v764 = vld [vmem:[%s736 + $0x68] sm:$0xff]
                  %765 = vst [vmem:[%s737 + $0x68] sm:$0xff] %v764
                  %v766 = vld [vmem:[%s736 + $0x70] sm:$0xff]
                  %767 = vst [vmem:[%s737 + $0x70] sm:$0xff] %v766
                  %v768 = vld [vmem:[%s736 + $0x78] sm:$0xff]
                  %769 = vst [vmem:[%s737 + $0x78] sm:$0xff] %v768
                  %s770 = sadd.s32 1, %s735
                  %p771 = scmp.ge.s32.totalorder %s770, %s728
                  %s772 = scalar_select %p771, 0, %s770
                  %s773 = smul.u32 %s772, 128
                  %s774 = smul.u32 %s772, 128
                  %s775 = scalar_lea.vmem %s631, %s773 [#allocation2]
                  %s776 = scalar_lea.vmem %s642, %s774
                $region75: #{tpu_custom_call.1} parent=69 // loop_footer
                  %s732 = sadd.s32 %s730, 1
                $region76: #{tpu_custom_call.1} parent=69 // loop_footer_branch
                  %729 = sbr.rel target = $region72
                $region77: #{tpu_custom_call.1} parent=69 // loop_exit
                  _
                %s777 = sshrl.u32 %s638, 4
                %s778 = sand.u32 %s638, 15
                %s779 = smul.u32 %s777, 16
                %s780 = smul.u32 8, %s779
                %s781 = scalar_lea.vmem %s631, %s780 [#allocation2]
                %s782 = smul.u32 8, %s779
                %s783 = scalar_lea.vmem %s642, %s782
                // While loop
                $region78: #{tpu_custom_call.1} parent=69 // loop_pre_header
                  _
                $region79: #{tpu_custom_call.1} parent=69 // loop_header
                  %s785 = sphi 0, %s787
                  %p786 = scmp.ge.s32.totalorder %s785, %s778
                  %s790 = sphi 0, %s797
                  %s791 = sphi %s781, %s800
                  %s792 = sphi %s783, %s801
                $region80: #{tpu_custom_call.1} parent=69 // loop_header_branch
                  %789 = sbr.rel (%p786) target = $region84
                $region81: #{tpu_custom_call.1} parent=69 // loop_body
                  %v793 = vld [vmem:[%s791] sm:$0xff]
                  %794 = vst [vmem:[%s792] sm:$0xff] %v793
                  %s795 = sadd.s32 1, %s790
                  %p796 = scmp.ge.s32.totalorder %s795, %s778
                  %s797 = scalar_select %p796, 0, %s795
                  %s798 = smul.u32 %s797, 8
                  %s799 = smul.u32 %s797, 8
                  %s800 = scalar_lea.vmem %s781, %s798 [#allocation2]
                  %s801 = scalar_lea.vmem %s783, %s799
                $region82: #{tpu_custom_call.1} parent=69 // loop_footer
                  %s787 = sadd.s32 %s785, 1
                $region83: #{tpu_custom_call.1} parent=69 // loop_footer_branch
                  %784 = sbr.rel target = $region79
                $region84: #{tpu_custom_call.1} parent=69 // loop_exit
                  _
              $region70: #{tpu_custom_call.1} parent=47 // pred_fallthru
                _
              // Predicated region
              $region85: #{tpu_custom_call.1} parent=47 // pred_check
                _
              $region86: #{tpu_custom_call.1} parent=47 // pred_check_branch
                %803 = sbr.rel target = $region88
              $region87: #{tpu_custom_call.1} parent=47 // pred_region
                _
              $region88: #{tpu_custom_call.1} parent=47 // pred_fallthru
                _
            $region48: #{tpu_custom_call.1} parent=43 // pred_fallthru
              _
            // Predicated region
            $region49: #{tpu_custom_call.1} parent=43 // pred_check
              _
            $region50: #{tpu_custom_call.1} parent=43 // pred_check_branch
              %649 = sbr.rel target = $region52
            $region51: #{tpu_custom_call.1} parent=43 // pred_region
              %s651 = ssub.s32 256, 1
              %s652 = sshrl.u32 %s638, 4
              // While loop
              $region53: #{tpu_custom_call.1} parent=51 // loop_pre_header
                _
              $region54: #{tpu_custom_call.1} parent=51 // loop_header
                %s654 = sphi 0, %s656
                %p655 = scmp.ge.s32.totalorder %s654, %s652
                %s659 = sphi 0, %s696
                %s660 = sphi %s631, %s699
                %s661 = sphi %s642, %s700
              $region55: #{tpu_custom_call.1} parent=51 // loop_header_branch
                %658 = sbr.rel (%p655) target = $region59
              $region56: #{tpu_custom_call.1} parent=51 // loop_body
                %v662 = vld [vmem:[%s660] sm:%s651]
                %663 = vst [vmem:[%s661] sm:%s651] %v662
                %v664 = vld [vmem:[%s660 + $0x8] sm:%s651]
                %665 = vst [vmem:[%s661 + $0x8] sm:%s651] %v664
                %v666 = vld [vmem:[%s660 + $0x10] sm:%s651]
                %667 = vst [vmem:[%s661 + $0x10] sm:%s651] %v666
                %v668 = vld [vmem:[%s660 + $0x18] sm:%s651]
                %669 = vst [vmem:[%s661 + $0x18] sm:%s651] %v668
                %v670 = vld [vmem:[%s660 + $0x20] sm:%s651]
                %671 = vst [vmem:[%s661 + $0x20] sm:%s651] %v670
                %v672 = vld [vmem:[%s660 + $0x28] sm:%s651]
                %673 = vst [vmem:[%s661 + $0x28] sm:%s651] %v672
                %v674 = vld [vmem:[%s660 + $0x30] sm:%s651]
                %675 = vst [vmem:[%s661 + $0x30] sm:%s651] %v674
                %v676 = vld [vmem:[%s660 + $0x38] sm:%s651]
                %677 = vst [vmem:[%s661 + $0x38] sm:%s651] %v676
                %v678 = vld [vmem:[%s660 + $0x40] sm:%s651]
                %679 = vst [vmem:[%s661 + $0x40] sm:%s651] %v678
                %v680 = vld [vmem:[%s660 + $0x48] sm:%s651]
                %681 = vst [vmem:[%s661 + $0x48] sm:%s651] %v680
                %v682 = vld [vmem:[%s660 + $0x50] sm:%s651]
                %683 = vst [vmem:[%s661 + $0x50] sm:%s651] %v682
                %v684 = vld [vmem:[%s660 + $0x58] sm:%s651]
                %685 = vst [vmem:[%s661 + $0x58] sm:%s651] %v684
                %v686 = vld [vmem:[%s660 + $0x60] sm:%s651]
                %687 = vst [vmem:[%s661 + $0x60] sm:%s651] %v686
                %v688 = vld [vmem:[%s660 + $0x68] sm:%s651]
                %689 = vst [vmem:[%s661 + $0x68] sm:%s651] %v688
                %v690 = vld [vmem:[%s660 + $0x70] sm:%s651]
                %691 = vst [vmem:[%s661 + $0x70] sm:%s651] %v690
                %v692 = vld [vmem:[%s660 + $0x78] sm:%s651]
                %693 = vst [vmem:[%s661 + $0x78] sm:%s651] %v692
                %s694 = sadd.s32 1, %s659
                %p695 = scmp.ge.s32.totalorder %s694, %s652
                %s696 = scalar_select %p695, 0, %s694
                %s697 = smul.u32 %s696, 128
                %s698 = smul.u32 %s696, 128
                %s699 = scalar_lea.vmem %s631, %s697 [#allocation2]
                %s700 = scalar_lea.vmem %s642, %s698
              $region57: #{tpu_custom_call.1} parent=51 // loop_footer
                %s656 = sadd.s32 %s654, 1
              $region58: #{tpu_custom_call.1} parent=51 // loop_footer_branch
                %653 = sbr.rel target = $region54
              $region59: #{tpu_custom_call.1} parent=51 // loop_exit
                _
              %s701 = sshrl.u32 %s638, 4
              %s702 = sand.u32 %s638, 15
              %s703 = smul.u32 %s701, 16
              %s704 = smul.u32 8, %s703
              %s705 = scalar_lea.vmem %s631, %s704 [#allocation2]
              %s706 = smul.u32 8, %s703
              %s707 = scalar_lea.vmem %s642, %s706
              // While loop
              $region60: #{tpu_custom_call.1} parent=51 // loop_pre_header
                _
              $region61: #{tpu_custom_call.1} parent=51 // loop_header
                %s709 = sphi 0, %s711
                %p710 = scmp.ge.s32.totalorder %s709, %s702
                %s714 = sphi 0, %s721
                %s715 = sphi %s705, %s724
                %s716 = sphi %s707, %s725
              $region62: #{tpu_custom_call.1} parent=51 // loop_header_branch
                %713 = sbr.rel (%p710) target = $region66
              $region63: #{tpu_custom_call.1} parent=51 // loop_body
                %v717 = vld [vmem:[%s715] sm:%s651]
                %718 = vst [vmem:[%s716] sm:%s651] %v717
                %s719 = sadd.s32 1, %s714
                %p720 = scmp.ge.s32.totalorder %s719, %s702
                %s721 = scalar_select %p720, 0, %s719
                %s722 = smul.u32 %s721, 8
                %s723 = smul.u32 %s721, 8
                %s724 = scalar_lea.vmem %s705, %s722 [#allocation2]
                %s725 = scalar_lea.vmem %s707, %s723
              $region64: #{tpu_custom_call.1} parent=51 // loop_footer
                %s711 = sadd.s32 %s709, 1
              $region65: #{tpu_custom_call.1} parent=51 // loop_footer_branch
                %708 = sbr.rel target = $region61
              $region66: #{tpu_custom_call.1} parent=51 // loop_exit
                _
            $region52: #{tpu_custom_call.1} parent=43 // pred_fallthru
              _
          $region44: #{tpu_custom_call.1} parent=39 // pred_fallthru
            _
          %804 = vnop
        $region40: #{tpu_custom_call.1} parent=35 // pred_fallthru
          _
      $region36: #{tpu_custom_call.1} parent=5 // pred_fallthru
        _
      %p805 = scmp.le.s32.totalorder 2, %s10
      // Predicated region
      $region89: #{tpu_custom_call.1} parent=5 // pred_check
        %p806 = pneg %p805
      $region90: #{tpu_custom_call.1} parent=5 // pred_check_branch
        %808 = sbr.rel (%p806) target = $region92
      $region91: #{tpu_custom_call.1} parent=5 // pred_region
        %s809 = ssub.s32 %s10, 2
        // Predicated region
        $region93: #{tpu_custom_call.1} parent=91 // pred_check
          %p810 = pneg %p133
        $region94: #{tpu_custom_call.1} parent=91 // pred_check_branch
          %812 = sbr.rel (%p810) target = $region96
        $region95: #{tpu_custom_call.1} parent=91 // pred_region
          %s813 = sand.u32 %s118, 1
          %s814 = sand.u32 %s118, 1
          %s815 = smul.addr %s814, 128
          %s816 = scalar_lea.vmem [#allocation2], %s815
        $region96: #{tpu_custom_call.1} parent=91 // pred_fallthru
          _
      $region92: #{tpu_custom_call.1} parent=5 // pred_fallthru
        _
    $region6: #{tpu_custom_call.1} parent=1 // loop_footer
      %s14 = sadd.s32 1, %s10
    $region7: #{tpu_custom_call.1} parent=1 // loop_footer_branch
      %9 = sbr.rel target = $region3
    $region8: #{tpu_custom_call.1} parent=1 // loop_exit
      _

</llo_original>
